<compile_context>
chip_gen: v7x
topology: tpu7x:2x2x1
jax: 0.10.0
libtpu: 0.0.40
codegen_flags: <defaults>
</compile_context>

<pallas_src>
import jax
import jax.numpy as jnp
from jax.experimental import pallas as pl
from jax.experimental.pallas import tpu as pltpu


# Max batch columns per grid step.  Per-column VMEM cost is ~450 B (double-
# buffered x block + double-buffered out block + a couple of live (32, TB)
# f32 intermediates), so 32K columns is ~14 MiB -- comfortably inside the
# scoped-VMEM limit below on every chip (incl. v7x's 64 MiB physical VMEM)
# while keeping the ~0.35 us/step pipeline overhead at a few percent.
_TB_MAX = 32768


def _round_up(n, m):
    return (n + m - 1) // m * m


def _network_kernel(xt_ref, wd_ref, w1_ref, w2_ref, c_ref, o_ref):
    # Packed constant slab (32, 8) columns:
    #   0 = down_proj bias, 1 = net[0] bias, 2 = net[1] bias,
    #   3 = pred_proj weights, element [0, 4] = pred_proj bias.
    bd = c_ref[:, 0:1]        # (32, 1)
    b1 = c_ref[:, 1:2]        # (32, 1)
    b2 = c_ref[:, 2:3]        # (32, 1)
    wp = c_ref[:, 3:4]        # (32, 1)  pred_proj weights as a column
    bp = c_ref[0:1, 4:5]      # (1, 1)   pred_proj bias

    # down_proj: (32,10) @ (10,TB) + bd  ->  (32, TB)
    h = jnp.dot(wd_ref[...], xt_ref[...],
                preferred_element_type=jnp.float32) + bd

    # Residual blocks with the identity folded into the weights:
    #   relu((W + I)^T h + b)  ==  relu(W^T h + b + h)
    h = jnp.maximum(
        jnp.dot(w1_ref[...], h, preferred_element_type=jnp.float32) + b1, 0.0)
    h = jnp.maximum(
        jnp.dot(w2_ref[...], h, preferred_element_type=jnp.float32) + b2, 0.0)

    # pred_proj as VPU multiply + sublane reduction -> lane-dense (1, TB).
    o_ref[...] = (jnp.sum(h * wp, axis=0, keepdims=True) + bp
                  ).astype(o_ref.dtype)


def network_forward(x, params):
    """x: (B, 10) float32. params: weights stored (in,out), biases (1,out)."""
    B = x.shape[0]

    # Fold the residual identity into the 32x32 weights and pre-transpose all
    # weights once in the wrapper (tiny, one-time work).
    eye = jnp.eye(32, dtype=jnp.float32)
    wd_t = params["wd"].T                 # (32, 10)
    w1_t = (params["w1"] + eye).T         # (32, 32)
    w2_t = (params["w2"] + eye).T         # (32, 32)

    # Pack biases / pred weights / pred bias into one (32, 8) constant slab.
    consts = jnp.zeros((32, 8), jnp.float32)
    consts = consts.at[:, 0].set(params["bd"][0])
    consts = consts.at[:, 1].set(params["b1"][0])
    consts = consts.at[:, 2].set(params["b2"][0])
    consts = consts.at[:, 3].set(params["wp"][:, 0])
    consts = consts.at[0, 4].set(params["bp"][0, 0])

    # Batch tiling: TB is a multiple of 128 (it sits on the lane dim), capped
    # at _TB_MAX; pad B up to TB * num_tiles (padded columns sliced off below).
    num_tiles = -(-B // _TB_MAX)
    TB = _round_up(-(-B // num_tiles), 128)
    B_pad = TB * num_tiles
    xp = x if B_pad == B else jnp.pad(x, ((0, B_pad - B), (0, 0)))
    xt = xp.T                             # (10, B_pad): batch on lanes

    full = lambda a: pl.BlockSpec(a.shape, lambda i: (0,) * a.ndim)

    out = pl.pallas_call(
        _network_kernel,
        out_shape=jax.ShapeDtypeStruct((1, B_pad), jnp.float32),
        grid=(num_tiles,),
        in_specs=[
            pl.BlockSpec((10, TB), lambda i: (0, i)),          # x streams in
            full(wd_t), full(w1_t), full(w2_t), full(consts),  # VMEM-resident
        ],
        out_specs=pl.BlockSpec((1, TB), lambda i: (0, i)),     # lane-dense
        compiler_params=pltpu.CompilerParams(
            dimension_semantics=("parallel",),
            vmem_limit_bytes=48 * 1024 * 1024,
        ),
    )(xt, wd_t, w1_t, w2_t, consts)

    out = out.reshape(B_pad, 1)           # free reshape: row-major (1,B)==(B,1)
    return out[:B] if B_pad != B else out


def init_params(key):
    """Deterministic init mimicking PyTorch nn.Linear default (uniform +-1/sqrt(fan_in)).
    Weights stored as (in_features, out_features)."""
    def linear(k, fan_in, fan_out):
        kw, kb = jax.random.split(k)
        bound = 1.0 / jnp.sqrt(fan_in)
        w = jax.random.uniform(kw, (fan_in, fan_out), jnp.float32, -bound, bound)
        b = jax.random.uniform(kb, (1, fan_out), jnp.float32, -bound, bound)
        return w, b

    k0, k1, k2, k3 = jax.random.split(key, 4)
    wd, bd = linear(k0, 10, 32)   # down_proj
    w1, b1 = linear(k1, 32, 32)   # net[0]
    w2, b2 = linear(k2, 32, 32)   # net[1]
    wp, bp = linear(k3, 32, 1)    # pred_proj
    return dict(wd=wd, bd=bd, w1=w1, b1=b1, w2=w2, b2=b2, wp=wp, bp=bp)


def network_forward_ref(x, p):
    """Pure-JAX reference matching the PyTorch forward exactly."""
    h = x @ p["wd"] + p["bd"]
    h = jnp.maximum(h @ p["w1"] + p["b1"] + h, 0.0)
    h = jnp.maximum(h @ p["w2"] + p["b2"] + h, 0.0)
    return h @ p["wp"] + p["bp"]


# TODO(synk): Network.update (random parameter perturbation for the genetic
# search) is a host-side utility, not part of the forward pass; not a kernel.

if __name__ == "__main__":
    key = jax.random.PRNGKey(0)
    kx, kp = jax.random.split(key)

    B = 8
    x = jax.random.normal(kx, (B, 10), dtype=jnp.float32)
    params = init_params(kp)

    out = jax.block_until_ready(network_forward(x, params))
    ref = network_forward_ref(x, params)

    assert out.shape == (B, 1)
    # Folding W+I, the transposed matmul order and the sublane-reduction
    # pred_proj reorder f32 rounding slightly.
    assert jnp.allclose(out, ref, atol=1e-4, rtol=1e-4), \
        float(jnp.max(jnp.abs(out - ref)))

    print("KERNEL_OK")
</pallas_src>

<mosaic_0001>
module attributes {stable_mosaic.version = 11 : i64} {
  func.func @_network_kernel(%arg0: i32, %arg1: memref<10x128xf32, #tpu.memory_space<vmem>>, %arg2: memref<32x10xf32, #tpu.memory_space<vmem>>, %arg3: memref<32x32xf32, #tpu.memory_space<vmem>>, %arg4: memref<32x32xf32, #tpu.memory_space<vmem>>, %arg5: memref<32x8xf32, #tpu.memory_space<vmem>>, %arg6: memref<1x128xf32, #tpu.memory_space<vmem>>) attributes {dimension_semantics = [#tpu.dimension_semantics<parallel>], iteration_bounds = array<i64: 1>, scalar_prefetch = 0 : i64, scratch_operands = 0 : i64, tpu.core_type = #tpu.core_type<tc>, window_params = [{transform_indices = @transform_0, window_bounds = array<i64: 10, 128>}, {pipeline_mode = #tpu.pipeline_mode<synchronous>, transform_indices = @transform_1, window_bounds = array<i64: 32, 10>}, {pipeline_mode = #tpu.pipeline_mode<synchronous>, transform_indices = @transform_2, window_bounds = array<i64: 32, 32>}, {pipeline_mode = #tpu.pipeline_mode<synchronous>, transform_indices = @transform_3, window_bounds = array<i64: 32, 32>}, {pipeline_mode = #tpu.pipeline_mode<synchronous>, transform_indices = @transform_4, window_bounds = array<i64: 32, 8>}, {transform_indices = @transform_5, window_bounds = array<i64: 1, 128>}]} {
    %c0 = arith.constant 0 : index
    %c0_0 = arith.constant 0 : index
    %0 = vector.load %arg5[%c0, %c0_0] : memref<32x8xf32, #tpu.memory_space<vmem>>, vector<32x1xf32>
    %c0_1 = arith.constant 0 : index
    %c1 = arith.constant 1 : index
    %1 = vector.load %arg5[%c0_1, %c1] : memref<32x8xf32, #tpu.memory_space<vmem>>, vector<32x1xf32>
    %c0_2 = arith.constant 0 : index
    %c2 = arith.constant 2 : index
    %2 = vector.load %arg5[%c0_2, %c2] : memref<32x8xf32, #tpu.memory_space<vmem>>, vector<32x1xf32>
    %c0_3 = arith.constant 0 : index
    %c3 = arith.constant 3 : index
    %3 = vector.load %arg5[%c0_3, %c3] : memref<32x8xf32, #tpu.memory_space<vmem>>, vector<32x1xf32>
    %c0_4 = arith.constant 0 : index
    %c4 = arith.constant 4 : index
    %4 = vector.load %arg5[%c0_4, %c4] : memref<32x8xf32, #tpu.memory_space<vmem>>, vector<1x1xf32>
    %c0_5 = arith.constant 0 : index
    %c0_6 = arith.constant 0 : index
    %5 = vector.load %arg2[%c0_5, %c0_6] : memref<32x10xf32, #tpu.memory_space<vmem>>, vector<32x10xf32>
    %c0_7 = arith.constant 0 : index
    %c0_8 = arith.constant 0 : index
    %6 = vector.load %arg1[%c0_7, %c0_8] : memref<10x128xf32, #tpu.memory_space<vmem>>, vector<10x128xf32>
    %cst = arith.constant dense<0.000000e+00> : vector<32x128xf32>
    %7 = tpu.matmul %5, %6, %cst {dimension_numbers = #tpu.dot_dimension_numbers<[1], [0], [0], [1], [0, 0, 1, 1], [], []>} : vector<32x10xf32>, vector<10x128xf32>, vector<32x128xf32> -> vector<32x128xf32>
    %8 = vector.broadcast %0 : vector<32x1xf32> to vector<32x128xf32>
    %9 = arith.addf %7, %8 : vector<32x128xf32>
    %c0_9 = arith.constant 0 : index
    %c0_10 = arith.constant 0 : index
    %10 = vector.load %arg3[%c0_9, %c0_10] : memref<32x32xf32, #tpu.memory_space<vmem>>, vector<32x32xf32>
    %cst_11 = arith.constant dense<0.000000e+00> : vector<32x128xf32>
    %11 = tpu.matmul %10, %9, %cst_11 {dimension_numbers = #tpu.dot_dimension_numbers<[1], [0], [0], [1], [0, 0, 1, 1], [], []>} : vector<32x32xf32>, vector<32x128xf32>, vector<32x128xf32> -> vector<32x128xf32>
    %12 = vector.broadcast %1 : vector<32x1xf32> to vector<32x128xf32>
    %13 = arith.addf %11, %12 : vector<32x128xf32>
    %cst_12 = arith.constant 0.000000e+00 : f32
    %14 = vector.broadcast %cst_12 : f32 to vector<32x128xf32>
    %15 = arith.maximumf %13, %14 : vector<32x128xf32>
    %c0_13 = arith.constant 0 : index
    %c0_14 = arith.constant 0 : index
    %16 = vector.load %arg4[%c0_13, %c0_14] : memref<32x32xf32, #tpu.memory_space<vmem>>, vector<32x32xf32>
    %cst_15 = arith.constant dense<0.000000e+00> : vector<32x128xf32>
    %17 = tpu.matmul %16, %15, %cst_15 {dimension_numbers = #tpu.dot_dimension_numbers<[1], [0], [0], [1], [0, 0, 1, 1], [], []>} : vector<32x32xf32>, vector<32x128xf32>, vector<32x128xf32> -> vector<32x128xf32>
    %18 = vector.broadcast %2 : vector<32x1xf32> to vector<32x128xf32>
    %19 = arith.addf %17, %18 : vector<32x128xf32>
    %cst_16 = arith.constant 0.000000e+00 : f32
    %20 = vector.broadcast %cst_16 : f32 to vector<32x128xf32>
    %21 = arith.maximumf %19, %20 : vector<32x128xf32>
    %22 = vector.broadcast %3 : vector<32x1xf32> to vector<32x128xf32>
    %23 = arith.mulf %21, %22 : vector<32x128xf32>
    %cst_17 = arith.constant dense<0.000000e+00> : vector<128xf32>
    %24 = vector.multi_reduction <add>, %23, %cst_17 [0] : vector<32x128xf32> to vector<128xf32>
    %25 = vector.shape_cast %24 : vector<128xf32> to vector<1x128xf32>
    %26 = vector.broadcast %4 : vector<1x1xf32> to vector<1x128xf32>
    %27 = arith.addf %25, %26 : vector<1x128xf32>
    %c0_18 = arith.constant 0 : index
    %c0_19 = arith.constant 0 : index
    %28 = vector.load %arg6[%c0_18, %c0_19] : memref<1x128xf32, #tpu.memory_space<vmem>>, vector<1x128xf32>
    tpu.vector_store %arg6[%c0_18, %c0_19], %27 {strides = array<i32>} : memref<1x128xf32, #tpu.memory_space<vmem>>, vector<1x128xf32>,
    return
  }
  func.func @transform_0(%arg0: i32) -> (i32, i32) {
    %c0_i32 = arith.constant 0 : i32
    %c0_i32_0 = arith.constant 0 : i32
    return %c0_i32, %arg0 : i32, i32
  }
  func.func @transform_1(%arg0: i32) -> (i32, i32) {
    %c0_i32 = arith.constant 0 : i32
    %c0_i32_0 = arith.constant 0 : i32
    %c0_i32_1 = arith.constant 0 : i32
    return %c0_i32, %c0_i32_0 : i32, i32
  }
  func.func @transform_2(%arg0: i32) -> (i32, i32) {
    %c0_i32 = arith.constant 0 : i32
    %c0_i32_0 = arith.constant 0 : i32
    %c0_i32_1 = arith.constant 0 : i32
    return %c0_i32, %c0_i32_0 : i32, i32
  }
  func.func @transform_3(%arg0: i32) -> (i32, i32) {
    %c0_i32 = arith.constant 0 : i32
    %c0_i32_0 = arith.constant 0 : i32
    %c0_i32_1 = arith.constant 0 : i32
    return %c0_i32, %c0_i32_0 : i32, i32
  }
  func.func @transform_4(%arg0: i32) -> (i32, i32) {
    %c0_i32 = arith.constant 0 : i32
    %c0_i32_0 = arith.constant 0 : i32
    %c0_i32_1 = arith.constant 0 : i32
    return %c0_i32, %c0_i32_0 : i32, i32
  }
  func.func @transform_5(%arg0: i32) -> (i32, i32) {
    %c0_i32 = arith.constant 0 : i32
    %c0_i32_0 = arith.constant 0 : i32
    return %c0_i32, %arg0 : i32, i32
  }
}

</mosaic_0001>

<llo_original>
// kernel: tpu_custom_call.1
$region0: #{tpu_custom_call.1}
  #allocation0 [shape = 'u32[]', space=smem, size = 0x4, offset = 0x4, fixed_abs, tag = 'smem constant byte address 0x4 - core index']
  #allocation1 [shape = 'u32[144,128]{1,0:T(1,128)}', space=vmem, size = 0x12000, scoped, tag = 'internal scratch']
  %s0 = inlined_call_operand.vmem [shape: f32[10,128], index: 0, kind: input, shape index: {}]
  %s1 = inlined_call_operand.vmem [shape: f32[32,10], index: 1, kind: input, shape index: {}]
  %s2 = inlined_call_operand.vmem [shape: f32[32,32], index: 2, kind: input, shape index: {}]
  %s3 = inlined_call_operand.vmem [shape: f32[32,32], index: 3, kind: input, shape index: {}]
  %s4 = inlined_call_operand.vmem [shape: f32[32,8], index: 4, kind: input, shape index: {}]
  %s5 = inlined_call_operand.hbm [shape: f32[1,128], index: 5, kind: output, shape index: {}]
  %s6 = sld [smem:[#allocation0]]
  $region30: #{tpu_custom_call.1} parent=0
    _
  %s8 = ssub.s32 1, %s6
  %s9 = scalar_select 0, %s8, %s6
  $region1: #{tpu_custom_call.1} parent=0
    #allocation2 [shape = 'u8[512]{0}', space=vmem, size = 0x400, scoped, tag = 'output window, operand 0, single buffered']
    #allocation3 [shape = 's32[1]{0}', space=sflag, size = 0x4, scoped, tag = 'scoped memory for tpu_custom_call.1']
    %10 = vsyncpa [#allocation3], 0
    // Predicated region
    $region2: #{tpu_custom_call.1} parent=1 // pred_check
      _
    $region3: #{tpu_custom_call.1} parent=1 // pred_check_branch
      %12 = sbr.rel (0) target = $region5
    $region4: #{tpu_custom_call.1} parent=1 // pred_region
      _
    $region5: #{tpu_custom_call.1} parent=1 // pred_fallthru
      _
    // Predicated region
    $region6: #{tpu_custom_call.1} parent=1 // pred_check
      _
    $region7: #{tpu_custom_call.1} parent=1 // pred_check_branch
      %14 = sbr.rel (0) target = $region9
    $region8: #{tpu_custom_call.1} parent=1 // pred_region
      _
    $region9: #{tpu_custom_call.1} parent=1 // pred_fallthru
      _
    // Predicated region
    $region10: #{tpu_custom_call.1} parent=1 // pred_check
      _
    $region11: #{tpu_custom_call.1} parent=1 // pred_check_branch
      %16 = sbr.rel (0) target = $region13
    $region12: #{tpu_custom_call.1} parent=1 // pred_region
      _
    $region13: #{tpu_custom_call.1} parent=1 // pred_fallthru
      _
    // Predicated region
    $region14: #{tpu_custom_call.1} parent=1 // pred_check
      _
    $region15: #{tpu_custom_call.1} parent=1 // pred_check_branch
      %18 = sbr.rel (0) target = $region17
    $region16: #{tpu_custom_call.1} parent=1 // pred_region
      _
    $region17: #{tpu_custom_call.1} parent=1 // pred_fallthru
      _
    // Predicated region
    $region18: #{tpu_custom_call.1} parent=1 // pred_check
      _
    $region19: #{tpu_custom_call.1} parent=1 // pred_check_branch
      %20 = sbr.rel (0) target = $region21
    $region20: #{tpu_custom_call.1} parent=1 // pred_region
      _
    $region21: #{tpu_custom_call.1} parent=1 // pred_fallthru
      _
    %v21 = vld [vmem:[%s4] sm:$0xff]
    %v22 = vld [vmem:[%s4 + $0x8] sm:$0xff]
    %v23 = vld [vmem:[%s4 + $0x10] sm:$0xff]
    %v24 = vld [vmem:[%s4 + $0x18] sm:$0xff]
    %v25 = vld [vmem:[%s4] sm:$0x1]
    %v26 = vld [vmem:[%s1] sm:$0xff]
    %v27 = vld [vmem:[%s1 + $0x8] sm:$0xff]
    %v28 = vld [vmem:[%s1 + $0x10] sm:$0xff]
    %v29 = vld [vmem:[%s1 + $0x18] sm:$0xff]
    %v30 = vld [vmem:[%s0] sm:$0xff]
    %v31 = vld [vmem:[%s0 + $0x8] sm:$0x3]
    %33 = vset.pattern.permute.xlu0 0
    %34 = vperm.xlu0 %33, %v21
    %v35 = vpop.permute.xlu0 %34
    %38 = vset.pattern.permute.xlu0 0
    %39 = vperm.xlu0 %38, %v22
    %v40 = vpop.permute.xlu0 %39
    %43 = vset.pattern.permute.xlu0 0
    %44 = vperm.xlu0 %43, %v23
    %v45 = vpop.permute.xlu0 %44
    %48 = vset.pattern.permute.xlu0 0
    %49 = vperm.xlu0 %48, %v24
    %v50 = vpop.permute.xlu0 %49
    %vm52 = vcmask 80896
    %v54 = vsel %vm52, %v26, 0
    %v57 = vsel %vm52, %v27, 0
    %v60 = vsel %vm52, %v28, 0
    %v63 = vsel %vm52, %v29, 0
    %vm65 = vcmask 1041408
    %v67 = vsel %vm65, %v31, 0
    %69 = vmatprep.subr.mxu0 0.0
    %70 = vmatpush1.msra.mxu0 %v30
    %71 = vmatprep.subr.mxu0 0.0
    %72 = vmatpush1.msra.mxu0 %v67
    %73 = vmatprep.subr.mxu0 0.0
    %74 = vmatpush1.msra.mxu0 0.0
    %75 = vmatprep.subr.mxu0 0.0
    %76 = vmatpush1.msra.mxu0 0.0
    %77 = vmatprep.subr.mxu0 0.0
    %78 = vmatpush1.msra.mxu0 0.0
    %79 = vmatprep.subr.mxu0 0.0
    %80 = vmatpush1.msra.mxu0 0.0
    %81 = vmatprep.subr.mxu0 0.0
    %82 = vmatpush1.msra.mxu0 0.0
    %83 = vmatprep.subr.mxu0 0.0
    %84 = vmatpush1.msra.mxu0 0.0
    %85 = vmatprep.subr.mxu0 0.0
    %86 = vmatpush1.msra.mxu0 0.0
    %87 = vmatprep.subr.mxu0 0.0
    %88 = vmatpush1.msra.mxu0 0.0
    %89 = vmatprep.subr.mxu0 0.0
    %90 = vmatpush1.msra.mxu0 0.0
    %91 = vmatprep.subr.mxu0 0.0
    %92 = vmatpush1.msra.mxu0 0.0
    %93 = vmatprep.subr.mxu0 0.0
    %94 = vmatpush1.msra.mxu0 0.0
    %95 = vmatprep.subr.mxu0 0.0
    %96 = vmatpush1.msra.mxu0 0.0
    %97 = vmatprep.subr.mxu0 0.0
    %98 = vmatpush1.msra.mxu0 0.0
    %99 = vmatprep.subr.mxu0 0.0
    %100 = vmatpush1.msra.mxu0 0.0
    %101 = vmatprep.subr.mxu0 0.0
    %102 = vmatpush1.msra.mxu0 0.0
    %103 = vmatprep.subr.mxu0 0.0
    %104 = vmatpush1.msra.mxu0 0.0
    %105 = vmatprep.subr.mxu0 0.0
    %106 = vmatpush1.msra.mxu0 0.0
    %107 = vmatprep.subr.mxu0 0.0
    %108 = vmatpush1.msra.mxu0 0.0
    %109 = vmatprep.subr.mxu0 0.0
    %110 = vmatpush1.msra.mxu0 0.0
    %111 = vmatprep.subr.mxu0 0.0
    %112 = vmatpush1.msra.mxu0 0.0
    %113 = vmatprep.subr.mxu0 0.0
    %114 = vmatpush1.msra.mxu0 0.0
    %115 = vmatprep.subr.mxu0 0.0
    %116 = vmatpush1.msra.mxu0 0.0
    %117 = vmatprep.subr.mxu0 0.0
    %118 = vmatpush1.msra.mxu0 0.0
    %119 = vmatprep.subr.mxu0 0.0
    %120 = vmatpush1.msra.mxu0 0.0
    %121 = vmatprep.subr.mxu0 0.0
    %122 = vmatpush1.msra.mxu0 0.0
    %123 = vmatprep.subr.mxu0 0.0
    %124 = vmatpush1.msra.mxu0 0.0
    %125 = vmatprep.subr.mxu0 0.0
    %126 = vmatpush1.msra.mxu0 0.0
    %127 = vmatprep.subr.mxu0 0.0
    %128 = vmatpush1.msra.mxu0 0.0
    %129 = vmatprep.subr.mxu0 0.0
    %130 = vmatpush1.msra.mxu0 0.0
    %131 = vmatprep.subr.mxu0 0.0
    %132 = vmatpush1.msra.mxu0 0.0
    %133 = vmatprep.mubr.f32.mxu0 0.0
    %134 = vmatmul.mubr.f32.gmra.mrb[0].mxu0 %v54
    %v135 = vpop.f32.mrb[0].mxu0
    %v136 = vadd.f32 %v35, %v135
    %v137 = vpop.f32.mrb[0].mxu0
    %138 = vmatprep.mubr.f32.mxu0 0.0
    %139 = vmatmul.mubr.f32.gmra.mrb[0].mxu0 %v57
    %v140 = vpop.f32.mrb[0].mxu0
    %v141 = vadd.f32 %v40, %v140
    %v142 = vpop.f32.mrb[0].mxu0
    %143 = vmatprep.mubr.f32.mxu0 0.0
    %144 = vmatmul.mubr.f32.gmra.mrb[0].mxu0 %v60
    %v145 = vpop.f32.mrb[0].mxu0
    %v146 = vadd.f32 %v45, %v145
    %v147 = vpop.f32.mrb[0].mxu0
    %148 = vmatprep.mubr.f32.mxu0 0.0
    %149 = vmatmul.mubr.f32.gmra.mrb[0].mxu0 %v63
    %v150 = vpop.f32.mrb[0].mxu0
    %v151 = vadd.f32 %v50, %v150
    %v152 = vpop.f32.mrb[0].mxu0
    %153 = vdwg.mxu0
    %v154 = vld [vmem:[%s2] sm:$0xff]
    %v155 = vld [vmem:[%s2 + $0x8] sm:$0xff]
    %v156 = vld [vmem:[%s2 + $0x10] sm:$0xff]
    %v157 = vld [vmem:[%s2 + $0x18] sm:$0xff]
    %158 = vset.pattern.permute.xlu0 1
    %159 = vperm.xlu0 %158, %v21
    %v160 = vpop.permute.xlu0 %159
    %162 = vset.pattern.permute.xlu0 1
    %163 = vperm.xlu0 %162, %v22
    %v164 = vpop.permute.xlu0 %163
    %166 = vset.pattern.permute.xlu0 1
    %167 = vperm.xlu0 %166, %v23
    %v168 = vpop.permute.xlu0 %167
    %170 = vset.pattern.permute.xlu0 1
    %171 = vperm.xlu0 %170, %v24
    %v172 = vpop.permute.xlu0 %171
    %vm174 = vcmask 261120
    %v176 = vsel %vm174, %v154, 0
    %v179 = vsel %vm174, %v155, 0
    %v182 = vsel %vm174, %v156, 0
    %v185 = vsel %vm174, %v157, 0
    %187 = vmatprep.subr.mxu0 0.0
    %188 = vmatpush1.msra.mxu0 %v136
    %189 = vmatprep.subr.mxu0 0.0
    %190 = vmatpush1.msra.mxu0 %v141
    %191 = vmatprep.subr.mxu0 0.0
    %192 = vmatpush1.msra.mxu0 %v146
    %193 = vmatprep.subr.mxu0 0.0
    %194 = vmatpush1.msra.mxu0 %v151
    %195 = vmatprep.subr.mxu0 0.0
    %196 = vmatpush1.msra.mxu0 0.0
    %197 = vmatprep.subr.mxu0 0.0
    %198 = vmatpush1.msra.mxu0 0.0
    %199 = vmatprep.subr.mxu0 0.0
    %200 = vmatpush1.msra.mxu0 0.0
    %201 = vmatprep.subr.mxu0 0.0
    %202 = vmatpush1.msra.mxu0 0.0
    %203 = vmatprep.subr.mxu0 0.0
    %204 = vmatpush1.msra.mxu0 0.0
    %205 = vmatprep.subr.mxu0 0.0
    %206 = vmatpush1.msra.mxu0 0.0
    %207 = vmatprep.subr.mxu0 0.0
    %208 = vmatpush1.msra.mxu0 0.0
    %209 = vmatprep.subr.mxu0 0.0
    %210 = vmatpush1.msra.mxu0 0.0
    %211 = vmatprep.subr.mxu0 0.0
    %212 = vmatpush1.msra.mxu0 0.0
    %213 = vmatprep.subr.mxu0 0.0
    %214 = vmatpush1.msra.mxu0 0.0
    %215 = vmatprep.subr.mxu0 0.0
    %216 = vmatpush1.msra.mxu0 0.0
    %217 = vmatprep.subr.mxu0 0.0
    %218 = vmatpush1.msra.mxu0 0.0
    %219 = vmatprep.subr.mxu0 0.0
    %220 = vmatpush1.msra.mxu0 0.0
    %221 = vmatprep.subr.mxu0 0.0
    %222 = vmatpush1.msra.mxu0 0.0
    %223 = vmatprep.subr.mxu0 0.0
    %224 = vmatpush1.msra.mxu0 0.0
    %225 = vmatprep.subr.mxu0 0.0
    %226 = vmatpush1.msra.mxu0 0.0
    %227 = vmatprep.subr.mxu0 0.0
    %228 = vmatpush1.msra.mxu0 0.0
    %229 = vmatprep.subr.mxu0 0.0
    %230 = vmatpush1.msra.mxu0 0.0
    %231 = vmatprep.subr.mxu0 0.0
    %232 = vmatpush1.msra.mxu0 0.0
    %233 = vmatprep.subr.mxu0 0.0
    %234 = vmatpush1.msra.mxu0 0.0
    %235 = vmatprep.subr.mxu0 0.0
    %236 = vmatpush1.msra.mxu0 0.0
    %237 = vmatprep.subr.mxu0 0.0
    %238 = vmatpush1.msra.mxu0 0.0
    %239 = vmatprep.subr.mxu0 0.0
    %240 = vmatpush1.msra.mxu0 0.0
    %241 = vmatprep.subr.mxu0 0.0
    %242 = vmatpush1.msra.mxu0 0.0
    %243 = vmatprep.subr.mxu0 0.0
    %244 = vmatpush1.msra.mxu0 0.0
    %245 = vmatprep.subr.mxu0 0.0
    %246 = vmatpush1.msra.mxu0 0.0
    %247 = vmatprep.subr.mxu0 0.0
    %248 = vmatpush1.msra.mxu0 0.0
    %249 = vmatprep.subr.mxu0 0.0
    %250 = vmatpush1.msra.mxu0 0.0
    %251 = vmatprep.mubr.f32.mxu0 0.0
    %252 = vmatmul.mubr.f32.gmra.mrb[0].mxu0 %v176
    %v253 = vpop.f32.mrb[0].mxu0
    %v254 = vadd.f32 %v160, %v253
    %v255 = vpop.f32.mrb[0].mxu0
    %256 = vmatprep.mubr.f32.mxu0 0.0
    %257 = vmatmul.mubr.f32.gmra.mrb[0].mxu0 %v179
    %v258 = vpop.f32.mrb[0].mxu0
    %v259 = vadd.f32 %v164, %v258
    %v260 = vpop.f32.mrb[0].mxu0
    %261 = vmatprep.mubr.f32.mxu0 0.0
    %262 = vmatmul.mubr.f32.gmra.mrb[0].mxu0 %v182
    %v263 = vpop.f32.mrb[0].mxu0
    %v264 = vadd.f32 %v168, %v263
    %v265 = vpop.f32.mrb[0].mxu0
    %266 = vmatprep.mubr.f32.mxu0 0.0
    %267 = vmatmul.mubr.f32.gmra.mrb[0].mxu0 %v185
    %v268 = vpop.f32.mrb[0].mxu0
    %v269 = vadd.f32 %v172, %v268
    %v270 = vpop.f32.mrb[0].mxu0
    %271 = vdwg.mxu0
    %v272 = vmax.f32 %v254, 0.0
    %v273 = vmax.f32 %v259, 0.0
    %v274 = vmax.f32 %v264, 0.0
    %v275 = vmax.f32 %v269, 0.0
    %v276 = vld [vmem:[%s3] sm:$0xff]
    %v277 = vld [vmem:[%s3 + $0x8] sm:$0xff]
    %v278 = vld [vmem:[%s3 + $0x10] sm:$0xff]
    %v279 = vld [vmem:[%s3 + $0x18] sm:$0xff]
    %280 = vset.pattern.permute.xlu0 2
    %281 = vperm.xlu0 %280, %v21
    %v282 = vpop.permute.xlu0 %281
    %284 = vset.pattern.permute.xlu0 2
    %285 = vperm.xlu0 %284, %v22
    %v286 = vpop.permute.xlu0 %285
    %288 = vset.pattern.permute.xlu0 2
    %289 = vperm.xlu0 %288, %v23
    %v290 = vpop.permute.xlu0 %289
    %292 = vset.pattern.permute.xlu0 2
    %293 = vperm.xlu0 %292, %v24
    %v294 = vpop.permute.xlu0 %293
    %v297 = vsel %vm174, %v276, 0
    %v300 = vsel %vm174, %v277, 0
    %v303 = vsel %vm174, %v278, 0
    %v306 = vsel %vm174, %v279, 0
    %308 = vmatprep.subr.mxu0 0.0
    %309 = vmatpush1.msra.mxu0 %v272
    %310 = vmatprep.subr.mxu0 0.0
    %311 = vmatpush1.msra.mxu0 %v273
    %312 = vmatprep.subr.mxu0 0.0
    %313 = vmatpush1.msra.mxu0 %v274
    %314 = vmatprep.subr.mxu0 0.0
    %315 = vmatpush1.msra.mxu0 %v275
    %316 = vmatprep.subr.mxu0 0.0
    %317 = vmatpush1.msra.mxu0 0.0
    %318 = vmatprep.subr.mxu0 0.0
    %319 = vmatpush1.msra.mxu0 0.0
    %320 = vmatprep.subr.mxu0 0.0
    %321 = vmatpush1.msra.mxu0 0.0
    %322 = vmatprep.subr.mxu0 0.0
    %323 = vmatpush1.msra.mxu0 0.0
    %324 = vmatprep.subr.mxu0 0.0
    %325 = vmatpush1.msra.mxu0 0.0
    %326 = vmatprep.subr.mxu0 0.0
    %327 = vmatpush1.msra.mxu0 0.0
    %328 = vmatprep.subr.mxu0 0.0
    %329 = vmatpush1.msra.mxu0 0.0
    %330 = vmatprep.subr.mxu0 0.0
    %331 = vmatpush1.msra.mxu0 0.0
    %332 = vmatprep.subr.mxu0 0.0
    %333 = vmatpush1.msra.mxu0 0.0
    %334 = vmatprep.subr.mxu0 0.0
    %335 = vmatpush1.msra.mxu0 0.0
    %336 = vmatprep.subr.mxu0 0.0
    %337 = vmatpush1.msra.mxu0 0.0
    %338 = vmatprep.subr.mxu0 0.0
    %339 = vmatpush1.msra.mxu0 0.0
    %340 = vmatprep.subr.mxu0 0.0
    %341 = vmatpush1.msra.mxu0 0.0
    %342 = vmatprep.subr.mxu0 0.0
    %343 = vmatpush1.msra.mxu0 0.0
    %344 = vmatprep.subr.mxu0 0.0
    %345 = vmatpush1.msra.mxu0 0.0
    %346 = vmatprep.subr.mxu0 0.0
    %347 = vmatpush1.msra.mxu0 0.0
    %348 = vmatprep.subr.mxu0 0.0
    %349 = vmatpush1.msra.mxu0 0.0
    %350 = vmatprep.subr.mxu0 0.0
    %351 = vmatpush1.msra.mxu0 0.0
    %352 = vmatprep.subr.mxu0 0.0
    %353 = vmatpush1.msra.mxu0 0.0
    %354 = vmatprep.subr.mxu0 0.0
    %355 = vmatpush1.msra.mxu0 0.0
    %356 = vmatprep.subr.mxu0 0.0
    %357 = vmatpush1.msra.mxu0 0.0
    %358 = vmatprep.subr.mxu0 0.0
    %359 = vmatpush1.msra.mxu0 0.0
    %360 = vmatprep.subr.mxu0 0.0
    %361 = vmatpush1.msra.mxu0 0.0
    %362 = vmatprep.subr.mxu0 0.0
    %363 = vmatpush1.msra.mxu0 0.0
    %364 = vmatprep.subr.mxu0 0.0
    %365 = vmatpush1.msra.mxu0 0.0
    %366 = vmatprep.subr.mxu0 0.0
    %367 = vmatpush1.msra.mxu0 0.0
    %368 = vmatprep.subr.mxu0 0.0
    %369 = vmatpush1.msra.mxu0 0.0
    %370 = vmatprep.subr.mxu0 0.0
    %371 = vmatpush1.msra.mxu0 0.0
    %372 = vmatprep.mubr.f32.mxu0 0.0
    %373 = vmatmul.mubr.f32.gmra.mrb[0].mxu0 %v297
    %v374 = vpop.f32.mrb[0].mxu0
    %v375 = vadd.f32 %v282, %v374
    %v376 = vpop.f32.mrb[0].mxu0
    %377 = vmatprep.mubr.f32.mxu0 0.0
    %378 = vmatmul.mubr.f32.gmra.mrb[0].mxu0 %v300
    %v379 = vpop.f32.mrb[0].mxu0
    %v380 = vadd.f32 %v286, %v379
    %v381 = vpop.f32.mrb[0].mxu0
    %382 = vmatprep.mubr.f32.mxu0 0.0
    %383 = vmatmul.mubr.f32.gmra.mrb[0].mxu0 %v303
    %v384 = vpop.f32.mrb[0].mxu0
    %v385 = vadd.f32 %v290, %v384
    %v386 = vpop.f32.mrb[0].mxu0
    %387 = vmatprep.mubr.f32.mxu0 0.0
    %388 = vmatmul.mubr.f32.gmra.mrb[0].mxu0 %v306
    %v389 = vpop.f32.mrb[0].mxu0
    %v390 = vadd.f32 %v294, %v389
    %v391 = vpop.f32.mrb[0].mxu0
    %392 = vdwg.mxu0
    %v393 = vmax.f32 %v375, 0.0
    %v394 = vmax.f32 %v380, 0.0
    %v395 = vmax.f32 %v385, 0.0
    %v396 = vmax.f32 %v390, 0.0
    %397 = vset.pattern.permute.xlu0 3
    %398 = vperm.xlu0 %397, %v21
    %v399 = vpop.permute.xlu0 %398
    %401 = vset.pattern.permute.xlu0 3
    %402 = vperm.xlu0 %401, %v22
    %v403 = vpop.permute.xlu0 %402
    %405 = vset.pattern.permute.xlu0 3
    %406 = vperm.xlu0 %405, %v23
    %v407 = vpop.permute.xlu0 %406
    %409 = vset.pattern.permute.xlu0 3
    %410 = vperm.xlu0 %409, %v24
    %v411 = vpop.permute.xlu0 %410
    %v413 = vmul.f32 %v393, %v399
    %v414 = vmul.f32 %v394, %v403
    %v415 = vmul.f32 %v395, %v407
    %v416 = vmul.f32 %v396, %v411
    %v417 = vadd.f32 %v413, %v414
    %v418 = vadd.f32 %v417, %v415
    %v419 = vadd.f32 %v418, %v416
    %v420 = vrot.slane %v419, 4
    %v421 = vadd.f32 %v419, %v420
    %v422 = vrot.slane %v421, 2
    %v423 = vadd.f32 %v421, %v422
    %v424 = vrot.slane %v423, 1
    %v425 = vadd.f32 %v423, %v424
    %427 = vset.pattern.permute.xlu0 4
    %428 = vperm.xlu0 %427, %v25
    %v429 = vpop.permute.xlu0 %428
    %v431 = vadd.f32 %v425, %v429
    %432 = vst [vmem:[#allocation2] sm:$0x1] %v431
    // Predicated region
    $region22: #{tpu_custom_call.1} parent=1 // pred_check
      _
    $region23: #{tpu_custom_call.1} parent=1 // pred_check_branch
      %434 = sbr.rel (0) target = $region25
    $region24: #{tpu_custom_call.1} parent=1 // pred_region
      %s436 = ssub.s32 16, 16
      %437 = vsyncadd [#allocation3], %s436
      %s439 = sshll.u32 [#allocation2], 4
      %s440 = int_to_ptr.vmem [resolvable:$true] %s439
      %442 = dma.vmem_to_hbm [thread:$0]  %s440, 16, %s5, [#allocation3]
    $region25: #{tpu_custom_call.1} parent=1 // pred_fallthru
      _
    // Predicated region
    $region26: #{tpu_custom_call.1} parent=1 // pred_check
      _
    $region27: #{tpu_custom_call.1} parent=1 // pred_check_branch
      %444 = sbr.rel (0) target = $region29
    $region28: #{tpu_custom_call.1} parent=1 // pred_region
      %445 = dma.done [#allocation3], 16
    $region29: #{tpu_custom_call.1} parent=1 // pred_fallthru
      _
    %446 = vsyncpa [#allocation3], 1

</llo_original>
